<compile_context>
chip_gen: v7x
topology: tpu7x:2x2x1
jax: 0.10.0
libtpu: 0.0.40
codegen_flags: <defaults>
</compile_context>

<pallas_src>
import functools

import jax
import jax.numpy as jnp
from jax.experimental import pallas as pl
from jax.experimental.pallas import tpu as pltpu


def _round_up(x, m):
    return ((x + m - 1) // m) * m


def _cdiv(a, b):
    return (a + b - 1) // b


def _pad2(x, rows, cols):
    r, c = x.shape
    return jnp.pad(x, ((0, rows - r), (0, cols - c)))


def _vmem_capacity_bytes():
    try:
        return int(pltpu.get_tpu_info().vmem_capacity_bytes)
    except Exception:
        return 64 * 1024 * 1024  # conservative fallback: v7x per-TC VMEM


def attdec_kernel(feat_ref, w1_ref, b1_ref, w3_ref, b3_ref, out_ref, hid_ref,
                  *, batch, tb):
    # fc1: bf16 operands on the MXU, f32 accumulation; bias + LeakyReLU in f32.
    h = jnp.dot(feat_ref[...], w1_ref[...],
                preferred_element_type=jnp.float32) + b1_ref[...]
    h = jnp.maximum(h, 0.2 * h)          # LeakyReLU(0.2): single VPU max
    h_bf16 = h.astype(jnp.bfloat16)
    hid_ref[...] = h_bf16                # hidden stored as bf16

    # fc3
    o = jnp.dot(h_bf16, w3_ref[...],
                preferred_element_type=jnp.float32) + b3_ref[...]

    # L2 normalize across dim 1. rsqrt -> EUP, multiply -> VPU.
    ss = jnp.sum(o * o, axis=1, keepdims=True)
    # Padded batch rows (zero feat, zero biases) would give rsqrt(0)=inf and
    # 0*inf=NaN written to HBM; clamp *only* those rows (they are sliced off
    # by the wrapper). Real rows keep exact reference semantics.
    row = pl.program_id(0) * tb + jax.lax.broadcasted_iota(jnp.int32, ss.shape, 0)
    ss = jnp.where(row < batch, ss, 1.0)
    out_ref[...] = (o * jax.lax.rsqrt(ss)).astype(out_ref.dtype)


def prepare_params(w1, b1, w3, b3):
    """Pad feature dims to multiples of 128 and cast weights to bf16 ONCE
    (hoisted out of the per-forward-call path). Zero padding is exact, so the
    matmuls and the L2 norm over dim 1 are unchanged."""
    res_size, ngh = w1.shape
    att_size = w3.shape[1]
    res_p = _round_up(res_size, 128)
    ngh_p = _round_up(ngh, 128)
    att_p = _round_up(att_size, 128)
    # TODO(synk): on v6e/v7x (2x256x256 MXU) rounding ngh_p/att_p to multiples
    # of 256 improves MXU column occupancy when they are not already 256-mults.
    return {
        "w1": _pad2(w1, res_p, ngh_p).astype(jnp.bfloat16),
        "b1": _pad2(b1.reshape(1, -1), 1, ngh_p).astype(jnp.float32),
        "w3": _pad2(w3, ngh_p, att_p).astype(jnp.bfloat16),
        "b3": _pad2(b3.reshape(1, -1), 1, att_p).astype(jnp.float32),
        "res_size": res_size, "ngh": ngh, "att_size": att_size,
    }


def attdec_forward(feat, params):
    """feat: [batch, resSize]. Returns (out [batch, attSize] f32,
    hidden [batch, ngh] bf16)."""
    w1_b, b1_p, w3_b, b3_p = params["w1"], params["b1"], params["w3"], params["b3"]
    res_size, ngh, att_size = params["res_size"], params["ngh"], params["att_size"]
    res_p, ngh_p = w1_b.shape
    att_p = w3_b.shape[1]
    batch = feat.shape[0]
    assert feat.shape[1] == res_size

    vmem_cap = _vmem_capacity_bytes()
    vmem_budget = int(vmem_cap * 0.70)    # tile-sizing budget (leaves headroom)
    vmem_limit = int(vmem_cap * 0.875)    # scoped-VMEM limit requested

    def run(single_buffer_weights):
        wmul = 1 if single_buffer_weights else 2
        weight_bytes = wmul * (res_p * ngh_p * 2 + ngh_p * att_p * 2
                               + ngh_p * 4 + att_p * 4)
        # Per-row VMEM: double-buffered feat(bf16)/hidden(bf16)/out(f32) tiles
        # plus in-kernel temporaries (f32 h, bf16 h, f32 o, normalized o).
        per_row = (2 * res_p * 2 + 2 * ngh_p * 2 + 2 * att_p * 4
                   + 4 * ngh_p + 2 * ngh_p + 8 * att_p)
        tb_fit = max(16, (vmem_budget - weight_bytes) // per_row)
        tb_max = max(16, min(1024, (tb_fit // 16) * 16))

        # Prefer several grid steps (megacore sharding on v7x + DMA/compute
        # overlap) while bounding batch-padding waste.
        n_steps = max(1, _cdiv(batch, tb_max))
        if batch >= 64:
            n_steps = max(n_steps, 4)
        elif batch >= 32:
            n_steps = max(n_steps, 2)
        tb = min(tb_max, _round_up(_cdiv(batch, n_steps), 16))

        batch_p = _round_up(batch, tb)
        grid = (batch_p // tb,)

        # feat: pad + pre-cast to bf16 (halves the feat HBM->VMEM DMA).
        feat_p = _pad2(feat.astype(jnp.bfloat16), batch_p, res_p)

        flops = 2 * batch_p * (res_p * ngh_p + ngh_p * att_p)
        bytes_accessed = (feat_p.size * 2
                          + w1_b.size * 2 + w3_b.size * 2
                          + b1_p.size * 4 + b3_p.size * 4
                          + batch_p * att_p * 4       # out (f32)
                          + batch_p * ngh_p * 2)      # hidden (bf16)

        w_mode = dict(pipeline_mode=pl.Buffered(1)) if single_buffer_weights else {}

        return pl.pallas_call(
            functools.partial(attdec_kernel, batch=batch, tb=tb),
            out_shape=(
                jax.ShapeDtypeStruct((batch_p, att_p), jnp.float32),
                jax.ShapeDtypeStruct((batch_p, ngh_p), jnp.bfloat16),
            ),
            grid_spec=pltpu.PrefetchScalarGridSpec(
                num_scalar_prefetch=0,
                grid=grid,
                in_specs=[
                    pl.BlockSpec((tb, res_p), lambda i: (i, 0)),              # feat tile
                    pl.BlockSpec((res_p, ngh_p), lambda i: (0, 0), **w_mode),  # w1 resident
                    pl.BlockSpec((1, ngh_p), lambda i: (0, 0), **w_mode),      # b1 resident
                    pl.BlockSpec((ngh_p, att_p), lambda i: (0, 0), **w_mode),  # w3 resident
                    pl.BlockSpec((1, att_p), lambda i: (0, 0), **w_mode),      # b3 resident
                ],
                out_specs=(
                    pl.BlockSpec((tb, att_p), lambda i: (i, 0)),   # out tile
                    pl.BlockSpec((tb, ngh_p), lambda i: (i, 0)),   # hidden tile
                ),
            ),
            compiler_params=pltpu.CompilerParams(
                dimension_semantics=("parallel",),
                vmem_limit_bytes=vmem_limit,
            ),
            cost_estimate=pl.CostEstimate(
                flops=flops,
                transcendentals=batch_p,
                bytes_accessed=bytes_accessed,
            ),
        )(feat_p, w1_b, b1_p, w3_b, b3_p)

    try:
        out_p, hidden_p = run(single_buffer_weights=True)
    except Exception:
        # pl.Buffered(1) on the resident weights is purely an optimization;
        # fall back to default double-buffered specs if this build rejects it.
        out_p, hidden_p = run(single_buffer_weights=False)

    # Strip padding.
    return out_p[:batch, :att_size], hidden_p[:batch, :ngh]


def init_params(key, res_size, ngh, att_size):
    # weights_init: Linear weights ~ N(0, 0.02), biases = 0.
    # Stored as [in, out] (transposed relative to PyTorch's [out, in]).
    k1, k2 = jax.random.split(key)
    w1 = 0.02 * jax.random.normal(k1, (res_size, ngh), dtype=jnp.float32)
    b1 = jnp.zeros((1, ngh), dtype=jnp.float32)
    w3 = 0.02 * jax.random.normal(k2, (ngh, att_size), dtype=jnp.float32)
    b3 = jnp.zeros((1, att_size), dtype=jnp.float32)
    return w1, b1, w3, b3


if __name__ == "__main__":
    batch, res_size, ngh, att_size = 8, 64, 32, 16

    key = jax.random.PRNGKey(0)
    k_feat, k_params = jax.random.split(key)
    feat = jax.random.normal(k_feat, (batch, res_size), dtype=jnp.float32)
    w1, b1, w3, b3 = init_params(k_params, res_size, ngh, att_size)

    params = prepare_params(w1, b1, w3, b3)   # pad + bf16-cast ONCE
    out, hidden = attdec_forward(feat, params)
    jax.block_until_ready(out)
    jax.block_until_ready(hidden)

    assert out.shape == (batch, att_size)
    assert hidden.shape == (batch, ngh)

    # Reference in plain f32 JAX (same math as the PyTorch forward). The kernel
    # uses bf16 matmul operands with f32 accumulation and bf16 hidden storage,
    # so compare with a bf16 tolerance.
    h_ref = feat @ w1 + b1
    h_ref = jnp.where(h_ref > 0, h_ref, 0.2 * h_ref)
    o_ref = h_ref @ w3 + b3
    o_ref = o_ref / jnp.sqrt(jnp.sum(o_ref**2, axis=1, keepdims=True))

    assert jnp.allclose(out, o_ref, atol=1e-2, rtol=1e-2), "out mismatch"
    assert jnp.allclose(hidden.astype(jnp.float32), h_ref,
                        atol=1e-2, rtol=1e-2), "hidden mismatch"

    print("KERNEL_OK")
</pallas_src>

<mosaic_0001>
module attributes {stable_mosaic.version = 11 : i64} {
  func.func @attdec_kernel(%arg0: i32, %arg1: memref<16x128xbf16, #tpu.memory_space<vmem>>, %arg2: memref<128x128xbf16, #tpu.memory_space<vmem>>, %arg3: memref<1x128xf32, #tpu.memory_space<vmem>>, %arg4: memref<128x128xbf16, #tpu.memory_space<vmem>>, %arg5: memref<1x128xf32, #tpu.memory_space<vmem>>, %arg6: memref<16x128xf32, #tpu.memory_space<vmem>>, %arg7: memref<16x128xbf16, #tpu.memory_space<vmem>>) attributes {dimension_semantics = [#tpu.dimension_semantics<parallel>], iteration_bounds = array<i64: 1>, scalar_prefetch = 0 : i64, scratch_operands = 0 : i64, tpu.core_type = #tpu.core_type<tc>, window_params = [{transform_indices = @transform_0, window_bounds = array<i64: 16, 128>}, {pipeline_mode = #tpu.pipeline_mode<synchronous>, transform_indices = @transform_1, window_bounds = array<i64: 128, 128>}, {pipeline_mode = #tpu.pipeline_mode<synchronous>, transform_indices = @transform_2, window_bounds = array<i64: 1, 128>}, {pipeline_mode = #tpu.pipeline_mode<synchronous>, transform_indices = @transform_3, window_bounds = array<i64: 128, 128>}, {pipeline_mode = #tpu.pipeline_mode<synchronous>, transform_indices = @transform_4, window_bounds = array<i64: 1, 128>}, {transform_indices = @transform_5, window_bounds = array<i64: 16, 128>}, {transform_indices = @transform_6, window_bounds = array<i64: 16, 128>}]} {
    %c0 = arith.constant 0 : index
    %c0_0 = arith.constant 0 : index
    %0 = vector.load %arg1[%c0, %c0_0] : memref<16x128xbf16, #tpu.memory_space<vmem>>, vector<16x128xbf16>
    %c0_1 = arith.constant 0 : index
    %c0_2 = arith.constant 0 : index
    %1 = vector.load %arg2[%c0_1, %c0_2] : memref<128x128xbf16, #tpu.memory_space<vmem>>, vector<128x128xbf16>
    %cst = arith.constant dense<0.000000e+00> : vector<16x128xf32>
    %2 = tpu.matmul %0, %1, %cst {dimension_numbers = #tpu.dot_dimension_numbers<[1], [0], [0], [1], [0, 0, 1, 1], [], []>} : vector<16x128xbf16>, vector<128x128xbf16>, vector<16x128xf32> -> vector<16x128xf32>
    %c0_3 = arith.constant 0 : index
    %c0_4 = arith.constant 0 : index
    %3 = vector.load %arg3[%c0_3, %c0_4] : memref<1x128xf32, #tpu.memory_space<vmem>>, vector<1x128xf32>
    %4 = vector.broadcast %3 : vector<1x128xf32> to vector<16x128xf32>
    %5 = arith.addf %2, %4 : vector<16x128xf32>
    %cst_5 = arith.constant 2.000000e-01 : f32
    %6 = vector.broadcast %cst_5 : f32 to vector<16x128xf32>
    %7 = arith.mulf %6, %5 : vector<16x128xf32>
    %8 = arith.maximumf %5, %7 : vector<16x128xf32>
    %9 = arith.truncf %8 : vector<16x128xf32> to vector<16x128xbf16>
    %c0_6 = arith.constant 0 : index
    %c0_7 = arith.constant 0 : index
    %10 = vector.load %arg7[%c0_6, %c0_7] : memref<16x128xbf16, #tpu.memory_space<vmem>>, vector<16x128xbf16>
    tpu.vector_store %arg7[%c0_6, %c0_7], %9 {strides = array<i32>} : memref<16x128xbf16, #tpu.memory_space<vmem>>, vector<16x128xbf16>,
    %c0_8 = arith.constant 0 : index
    %c0_9 = arith.constant 0 : index
    %11 = vector.load %arg4[%c0_8, %c0_9] : memref<128x128xbf16, #tpu.memory_space<vmem>>, vector<128x128xbf16>
    %cst_10 = arith.constant dense<0.000000e+00> : vector<16x128xf32>
    %12 = tpu.matmul %9, %11, %cst_10 {dimension_numbers = #tpu.dot_dimension_numbers<[1], [0], [0], [1], [0, 0, 1, 1], [], []>} : vector<16x128xbf16>, vector<128x128xbf16>, vector<16x128xf32> -> vector<16x128xf32>
    %c0_11 = arith.constant 0 : index
    %c0_12 = arith.constant 0 : index
    %13 = vector.load %arg5[%c0_11, %c0_12] : memref<1x128xf32, #tpu.memory_space<vmem>>, vector<1x128xf32>
    %14 = vector.broadcast %13 : vector<1x128xf32> to vector<16x128xf32>
    %15 = arith.addf %12, %14 : vector<16x128xf32>
    %16 = arith.mulf %15, %15 : vector<16x128xf32>
    %cst_13 = arith.constant dense<0.000000e+00> : vector<16xf32>
    %17 = vector.multi_reduction <add>, %16, %cst_13 [1] : vector<16x128xf32> to vector<16xf32>
    %18 = vector.shape_cast %17 : vector<16xf32> to vector<16x1xf32>
    %c16_i32 = arith.constant 16 : i32
    %19 = arith.muli %arg0, %c16_i32 : i32
    %20 = tpu.iota {dimensions = array<i32: 0>} : vector<16x1xi32>
    %21 = vector.broadcast %19 : i32 to vector<16x1xi32>
    %22 = arith.addi %21, %20 : vector<16x1xi32>
    %c8_i32 = arith.constant 8 : i32
    %23 = vector.broadcast %c8_i32 : i32 to vector<16x1xi32>
    %24 = arith.cmpi slt, %22, %23 : vector<16x1xi32>
    %cst_14 = arith.constant 1.000000e+00 : f32
    %25 = vector.broadcast %cst_14 : f32 to vector<16x1xf32>
    %26 = arith.select %24, %18, %25 : vector<16x1xi1>, vector<16x1xf32>
    %27 = math.rsqrt %26 : vector<16x1xf32>
    %28 = vector.broadcast %27 : vector<16x1xf32> to vector<16x128xf32>
    %29 = arith.mulf %15, %28 : vector<16x128xf32>
    %c0_15 = arith.constant 0 : index
    %c0_16 = arith.constant 0 : index
    %30 = vector.load %arg6[%c0_15, %c0_16] : memref<16x128xf32, #tpu.memory_space<vmem>>, vector<16x128xf32>
    tpu.vector_store %arg6[%c0_15, %c0_16], %29 {strides = array<i32>} : memref<16x128xf32, #tpu.memory_space<vmem>>, vector<16x128xf32>,
    return
  }
  func.func @transform_0(%arg0: i32) -> (i32, i32) {
    %c0_i32 = arith.constant 0 : i32
    %c0_i32_0 = arith.constant 0 : i32
    return %arg0, %c0_i32 : i32, i32
  }
  func.func @transform_1(%arg0: i32) -> (i32, i32) {
    %c0_i32 = arith.constant 0 : i32
    %c0_i32_0 = arith.constant 0 : i32
    %c0_i32_1 = arith.constant 0 : i32
    return %c0_i32, %c0_i32_0 : i32, i32
  }
  func.func @transform_2(%arg0: i32) -> (i32, i32) {
    %c0_i32 = arith.constant 0 : i32
    %c0_i32_0 = arith.constant 0 : i32
    %c0_i32_1 = arith.constant 0 : i32
    return %c0_i32, %c0_i32_0 : i32, i32
  }
  func.func @transform_3(%arg0: i32) -> (i32, i32) {
    %c0_i32 = arith.constant 0 : i32
    %c0_i32_0 = arith.constant 0 : i32
    %c0_i32_1 = arith.constant 0 : i32
    return %c0_i32, %c0_i32_0 : i32, i32
  }
  func.func @transform_4(%arg0: i32) -> (i32, i32) {
    %c0_i32 = arith.constant 0 : i32
    %c0_i32_0 = arith.constant 0 : i32
    %c0_i32_1 = arith.constant 0 : i32
    return %c0_i32, %c0_i32_0 : i32, i32
  }
  func.func @transform_5(%arg0: i32) -> (i32, i32) {
    %c0_i32 = arith.constant 0 : i32
    %c0_i32_0 = arith.constant 0 : i32
    return %arg0, %c0_i32 : i32, i32
  }
  func.func @transform_6(%arg0: i32) -> (i32, i32) {
    %c0_i32 = arith.constant 0 : i32
    %c0_i32_0 = arith.constant 0 : i32
    return %arg0, %c0_i32 : i32, i32
  }
}

module attributes {stable_mosaic.version = 11 : i64} {
  func.func @attdec_kernel(%arg0: i32, %arg1: memref<16x128xbf16, #tpu.memory_space<vmem>>, %arg2: memref<128x128xbf16, #tpu.memory_space<vmem>>, %arg3: memref<1x128xf32, #tpu.memory_space<vmem>>, %arg4: memref<128x128xbf16, #tpu.memory_space<vmem>>, %arg5: memref<1x128xf32, #tpu.memory_space<vmem>>, %arg6: memref<16x128xf32, #tpu.memory_space<vmem>>, %arg7: memref<16x128xbf16, #tpu.memory_space<vmem>>) attributes {dimension_semantics = [#tpu.dimension_semantics<parallel>], iteration_bounds = array<i64: 1>, scalar_prefetch = 0 : i64, scratch_operands = 0 : i64, tpu.core_type = #tpu.core_type<tc>, window_params = [{transform_indices = @transform_0, window_bounds = array<i64: 16, 128>}, {pipeline_mode = #tpu.pipeline_mode<synchronous>, transform_indices = @transform_1, window_bounds = array<i64: 128, 128>}, {pipeline_mode = #tpu.pipeline_mode<synchronous>, transform_indices = @transform_2, window_bounds = array<i64: 1, 128>}, {pipeline_mode = #tpu.pipeline_mode<synchronous>, transform_indices = @transform_3, window_bounds = array<i64: 128, 128>}, {pipeline_mode = #tpu.pipeline_mode<synchronous>, transform_indices = @transform_4, window_bounds = array<i64: 1, 128>}, {transform_indices = @transform_5, window_bounds = array<i64: 16, 128>}, {transform_indices = @transform_6, window_bounds = array<i64: 16, 128>}]} {
    %c0 = arith.constant 0 : index
    %c0_0 = arith.constant 0 : index
    %0 = vector.load %arg1[%c0, %c0_0] : memref<16x128xbf16, #tpu.memory_space<vmem>>, vector<16x128xbf16>
    %c0_1 = arith.constant 0 : index
    %c0_2 = arith.constant 0 : index
    %1 = vector.load %arg2[%c0_1, %c0_2] : memref<128x128xbf16, #tpu.memory_space<vmem>>, vector<128x128xbf16>
    %cst = arith.constant dense<0.000000e+00> : vector<16x128xf32>
    %2 = tpu.matmul %0, %1, %cst {dimension_numbers = #tpu.dot_dimension_numbers<[1], [0], [0], [1], [0, 0, 1, 1], [], []>} : vector<16x128xbf16>, vector<128x128xbf16>, vector<16x128xf32> -> vector<16x128xf32>
    %c0_3 = arith.constant 0 : index
    %c0_4 = arith.constant 0 : index
    %3 = vector.load %arg3[%c0_3, %c0_4] : memref<1x128xf32, #tpu.memory_space<vmem>>, vector<1x128xf32>
    %4 = vector.broadcast %3 : vector<1x128xf32> to vector<16x128xf32>
    %5 = arith.addf %2, %4 : vector<16x128xf32>
    %cst_5 = arith.constant 2.000000e-01 : f32
    %6 = vector.broadcast %cst_5 : f32 to vector<16x128xf32>
    %7 = arith.mulf %6, %5 : vector<16x128xf32>
    %8 = arith.maximumf %5, %7 : vector<16x128xf32>
    %9 = arith.truncf %8 : vector<16x128xf32> to vector<16x128xbf16>
    %c0_6 = arith.constant 0 : index
    %c0_7 = arith.constant 0 : index
    %10 = vector.load %arg7[%c0_6, %c0_7] : memref<16x128xbf16, #tpu.memory_space<vmem>>, vector<16x128xbf16>
    tpu.vector_store %arg7[%c0_6, %c0_7], %9 {strides = array<i32>} : memref<16x128xbf16, #tpu.memory_space<vmem>>, vector<16x128xbf16>,
    %c0_8 = arith.constant 0 : index
    %c0_9 = arith.constant 0 : index
    %11 = vector.load %arg4[%c0_8, %c0_9] : memref<128x128xbf16, #tpu.memory_space<vmem>>, vector<128x128xbf16>
    %cst_10 = arith.constant dense<0.000000e+00> : vector<16x128xf32>
    %12 = tpu.matmul %9, %11, %cst_10 {dimension_numbers = #tpu.dot_dimension_numbers<[1], [0], [0], [1], [0, 0, 1, 1], [], []>} : vector<16x128xbf16>, vector<128x128xbf16>, vector<16x128xf32> -> vector<16x128xf32>
    %c0_11 = arith.constant 0 : index
    %c0_12 = arith.constant 0 : index
    %13 = vector.load %arg5[%c0_11, %c0_12] : memref<1x128xf32, #tpu.memory_space<vmem>>, vector<1x128xf32>
    %14 = vector.broadcast %13 : vector<1x128xf32> to vector<16x128xf32>
    %15 = arith.addf %12, %14 : vector<16x128xf32>
    %16 = arith.mulf %15, %15 : vector<16x128xf32>
    %cst_13 = arith.constant dense<0.000000e+00> : vector<16xf32>
    %17 = vector.multi_reduction <add>, %16, %cst_13 [1] : vector<16x128xf32> to vector<16xf32>
    %18 = vector.shape_cast %17 : vector<16xf32> to vector<16x1xf32>
    %c16_i32 = arith.constant 16 : i32
    %19 = arith.muli %arg0, %c16_i32 : i32
    %20 = tpu.iota {dimensions = array<i32: 0>} : vector<16x1xi32>
    %21 = vector.broadcast %19 : i32 to vector<16x1xi32>
    %22 = arith.addi %21, %20 : vector<16x1xi32>
    %c8_i32 = arith.constant 8 : i32
    %23 = vector.broadcast %c8_i32 : i32 to vector<16x1xi32>
    %24 = arith.cmpi slt, %22, %23 : vector<16x1xi32>
    %cst_14 = arith.constant 1.000000e+00 : f32
    %25 = vector.broadcast %cst_14 : f32 to vector<16x1xf32>
    %26 = arith.select %24, %18, %25 : vector<16x1xi1>, vector<16x1xf32>
    %27 = math.rsqrt %26 : vector<16x1xf32>
    %28 = vector.broadcast %27 : vector<16x1xf32> to vector<16x128xf32>
    %29 = arith.mulf %15, %28 : vector<16x128xf32>
    %c0_15 = arith.constant 0 : index
    %c0_16 = arith.constant 0 : index
    %30 = vector.load %arg6[%c0_15, %c0_16] : memref<16x128xf32, #tpu.memory_space<vmem>>, vector<16x128xf32>
    tpu.vector_store %arg6[%c0_15, %c0_16], %29 {strides = array<i32>} : memref<16x128xf32, #tpu.memory_space<vmem>>, vector<16x128xf32>,
    return
  }
  func.func @transform_0(%arg0: i32) -> (i32, i32) {
    %c0_i32 = arith.constant 0 : i32
    %c0_i32_0 = arith.constant 0 : i32
    return %arg0, %c0_i32 : i32, i32
  }
  func.func @transform_1(%arg0: i32) -> (i32, i32) {
    %c0_i32 = arith.constant 0 : i32
    %c0_i32_0 = arith.constant 0 : i32
    %c0_i32_1 = arith.constant 0 : i32
    return %c0_i32, %c0_i32_0 : i32, i32
  }
  func.func @transform_2(%arg0: i32) -> (i32, i32) {
    %c0_i32 = arith.constant 0 : i32
    %c0_i32_0 = arith.constant 0 : i32
    %c0_i32_1 = arith.constant 0 : i32
    return %c0_i32, %c0_i32_0 : i32, i32
  }
  func.func @transform_3(%arg0: i32) -> (i32, i32) {
    %c0_i32 = arith.constant 0 : i32
    %c0_i32_0 = arith.constant 0 : i32
    %c0_i32_1 = arith.constant 0 : i32
    return %c0_i32, %c0_i32_0 : i32, i32
  }
  func.func @transform_4(%arg0: i32) -> (i32, i32) {
    %c0_i32 = arith.constant 0 : i32
    %c0_i32_0 = arith.constant 0 : i32
    %c0_i32_1 = arith.constant 0 : i32
    return %c0_i32, %c0_i32_0 : i32, i32
  }
  func.func @transform_5(%arg0: i32) -> (i32, i32) {
    %c0_i32 = arith.constant 0 : i32
    %c0_i32_0 = arith.constant 0 : i32
    return %arg0, %c0_i32 : i32, i32
  }
  func.func @transform_6(%arg0: i32) -> (i32, i32) {
    %c0_i32 = arith.constant 0 : i32
    %c0_i32_0 = arith.constant 0 : i32
    return %arg0, %c0_i32 : i32, i32
  }
}

</mosaic_0001>

<llo_original>
// kernel: tpu_custom_call.1
$region0: #{tpu_custom_call.1}
  #allocation0 [shape = 'u32[]', space=smem, size = 0x4, offset = 0x4, fixed_abs, tag = 'smem constant byte address 0x4 - core index']
  #allocation1 [shape = 'u32[144,128]{1,0:T(1,128)}', space=vmem, size = 0x12000, scoped, tag = 'internal scratch']
  %s0 = inlined_call_operand.hbm [shape: bf16[16,128], index: 0, kind: input, shape index: {}]
  %s1 = inlined_call_operand.hbm [shape: bf16[128,128], index: 1, kind: input, shape index: {}]
  %s2 = inlined_call_operand.vmem [shape: f32[1,128], index: 2, kind: input, shape index: {}]
  %s3 = inlined_call_operand.hbm [shape: bf16[128,128], index: 3, kind: input, shape index: {}]
  %s4 = inlined_call_operand.vmem [shape: f32[1,128], index: 4, kind: input, shape index: {}]
  %s5 = inlined_call_operand.hbm [shape: f32[16,128], index: 5, kind: output, shape index: {0}]
  %s6 = inlined_call_operand.hbm [shape: bf16[16,128], index: 6, kind: output, shape index: {1}]
  %7 = xla_tuple %s5, %s6
  %s8 = sld [smem:[#allocation0]]
  $region50: #{tpu_custom_call.1} parent=0
    _
  %s10 = ssub.s32 1, %s8
  %s11 = scalar_select 0, %s10, %s8
  $region1: #{tpu_custom_call.1} parent=0
    #allocation2 [shape = 'u8[4096]{0}', space=vmem, size = 0x1000, scoped, tag = 'input window, operand 0, single buffered']
    #allocation3 [shape = 's32[1]{0}', space=sflag, size = 0x4, scoped, tag = 'scoped memory for tpu_custom_call.1']
    #allocation4 [shape = 's32[1]{0}', space=sflag, size = 0x4, scoped, tag = 'scoped memory for tpu_custom_call.1']
    #allocation5 [shape = 'u8[32768]{0}', space=vmem, size = 0x8000, scoped, tag = 'input window, operand 1, single buffered']
    #allocation6 [shape = 's32[1]{0}', space=sflag, size = 0x4, scoped, tag = 'scoped memory for tpu_custom_call.1']
    #allocation7 [shape = 'u8[32768]{0}', space=vmem, size = 0x8000, scoped, tag = 'input window, operand 3, single buffered']
    #allocation8 [shape = 'u8[8192]{0}', space=vmem, size = 0x2000, scoped, tag = 'output window, operand 0, single buffered']
    #allocation9 [shape = 'u8[4096]{0}', space=vmem, size = 0x1000, scoped, tag = 'output window, operand 1, single buffered']
    #allocation10 [shape = 's32[1]{0}', space=sflag, size = 0x4, scoped, tag = 'scoped memory for tpu_custom_call.1']
    %12 = vsyncpa [#allocation3], 0
    %13 = vsyncpa [#allocation6], 0
    %14 = vsyncpa [#allocation4], 0
    %15 = vsyncpa [#allocation10], 0
    // Predicated region
    $region2: #{tpu_custom_call.1} parent=1 // pred_check
      _
    $region3: #{tpu_custom_call.1} parent=1 // pred_check_branch
      %17 = sbr.rel (0) target = $region5
    $region4: #{tpu_custom_call.1} parent=1 // pred_region
      %s19 = ssub.s32 128, 128
      %20 = vsyncadd [#allocation3], %s19
      %s21 = sshll.u32 [#allocation2], 4
      %s22 = int_to_ptr.vmem [resolvable:$true] %s21
      %27 = dma.hbm_to_vmem [thread:$0]  %s0, 128, %s22, [#allocation3], 64, 64, 4
    $region5: #{tpu_custom_call.1} parent=1 // pred_fallthru
      _
    // Predicated region
    $region6: #{tpu_custom_call.1} parent=1 // pred_check
      _
    $region7: #{tpu_custom_call.1} parent=1 // pred_check_branch
      %29 = sbr.rel (0) target = $region9
    $region8: #{tpu_custom_call.1} parent=1 // pred_region
      %s31 = ssub.s32 1024, 1024
      %32 = vsyncadd [#allocation6], %s31
      %s33 = sshll.u32 [#allocation5], 4
      %s34 = int_to_ptr.vmem [resolvable:$true] %s33
      %39 = dma.hbm_to_vmem [thread:$0]  %s1, 1024, %s34, [#allocation6], 64, 64, 4
    $region9: #{tpu_custom_call.1} parent=1 // pred_fallthru
      _
    // Predicated region
    $region10: #{tpu_custom_call.1} parent=1 // pred_check
      _
    $region11: #{tpu_custom_call.1} parent=1 // pred_check_branch
      %41 = sbr.rel (0) target = $region13
    $region12: #{tpu_custom_call.1} parent=1 // pred_region
      _
    $region13: #{tpu_custom_call.1} parent=1 // pred_fallthru
      _
    // Predicated region
    $region14: #{tpu_custom_call.1} parent=1 // pred_check
      _
    $region15: #{tpu_custom_call.1} parent=1 // pred_check_branch
      %43 = sbr.rel (0) target = $region17
    $region16: #{tpu_custom_call.1} parent=1 // pred_region
      %s45 = ssub.s32 1024, 1024
      %46 = vsyncadd [#allocation6], %s45
      %s47 = sshll.u32 [#allocation7], 4
      %s48 = int_to_ptr.vmem [resolvable:$true] %s47
      %53 = dma.hbm_to_vmem [thread:$0]  %s3, 1024, %s48, [#allocation6], 64, 64, 4
    $region17: #{tpu_custom_call.1} parent=1 // pred_fallthru
      _
    // Predicated region
    $region18: #{tpu_custom_call.1} parent=1 // pred_check
      _
    $region19: #{tpu_custom_call.1} parent=1 // pred_check_branch
      %55 = sbr.rel (0) target = $region21
    $region20: #{tpu_custom_call.1} parent=1 // pred_region
      _
    $region21: #{tpu_custom_call.1} parent=1 // pred_fallthru
      _
    // Predicated region
    $region22: #{tpu_custom_call.1} parent=1 // pred_check
      _
    $region23: #{tpu_custom_call.1} parent=1 // pred_check_branch
      %57 = sbr.rel (0) target = $region25
    $region24: #{tpu_custom_call.1} parent=1 // pred_region
      %58 = dma.done [#allocation3], 128
    $region25: #{tpu_custom_call.1} parent=1 // pred_fallthru
      _
    // Predicated region
    $region26: #{tpu_custom_call.1} parent=1 // pred_check
      _
    $region27: #{tpu_custom_call.1} parent=1 // pred_check_branch
      %60 = sbr.rel (0) target = $region29
    $region28: #{tpu_custom_call.1} parent=1 // pred_region
      %61 = dma.done [#allocation6], 1024
    $region29: #{tpu_custom_call.1} parent=1 // pred_fallthru
      _
    // Predicated region
    $region30: #{tpu_custom_call.1} parent=1 // pred_check
      _
    $region31: #{tpu_custom_call.1} parent=1 // pred_check_branch
      %63 = sbr.rel (0) target = $region33
    $region32: #{tpu_custom_call.1} parent=1 // pred_region
      %64 = dma.done [#allocation6], 1024
    $region33: #{tpu_custom_call.1} parent=1 // pred_fallthru
      _
    %v66 = vld [vmem:[#allocation2] sm:$0xf]
    %v67 = vld [vmem:[#allocation2 + $0x4] sm:$0xf]
    %v68 = vld [vmem:[#allocation5] sm:$0xf]
    %v69 = vld [vmem:[#allocation5 + $0x4] sm:$0xf]
    %v70 = vld [vmem:[#allocation5 + $0x8] sm:$0xf]
    %v71 = vld [vmem:[#allocation5 + $0xc] sm:$0xf]
    %v72 = vld [vmem:[#allocation5 + $0x10] sm:$0xf]
    %v73 = vld [vmem:[#allocation5 + $0x14] sm:$0xf]
    %v74 = vld [vmem:[#allocation5 + $0x18] sm:$0xf]
    %v75 = vld [vmem:[#allocation5 + $0x1c] sm:$0xf]
    %v76 = vld [vmem:[#allocation5 + $0x20] sm:$0xf]
    %v77 = vld [vmem:[#allocation5 + $0x24] sm:$0xf]
    %v78 = vld [vmem:[#allocation5 + $0x28] sm:$0xf]
    %v79 = vld [vmem:[#allocation5 + $0x2c] sm:$0xf]
    %v80 = vld [vmem:[#allocation5 + $0x30] sm:$0xf]
    %v81 = vld [vmem:[#allocation5 + $0x34] sm:$0xf]
    %v82 = vld [vmem:[#allocation5 + $0x38] sm:$0xf]
    %v83 = vld [vmem:[#allocation5 + $0x3c] sm:$0xf]
    %v84 = vld [vmem:[%s2] sm:$0x1]
    %v86 = vlaneseq
    %v87 = vshrl.u32 %v86, 7
    %v88 = vsub.s32 0, %v87
    %v89 = vrot.slane %v84, %v88
    %v93 = vunpack.c.l.b16 %v66
    %v94 = vunpack.c.l.b16 %v67
    %v95 = vpack.c.b16 %v94, %v93
    %v113 = vunpack.c.l.b16 %v68
    %v114 = vunpack.c.l.b16 %v69
    %v115 = vunpack.c.l.b16 %v70
    %v116 = vunpack.c.l.b16 %v71
    %v117 = vunpack.c.l.b16 %v72
    %v118 = vunpack.c.l.b16 %v73
    %v119 = vunpack.c.l.b16 %v74
    %v120 = vunpack.c.l.b16 %v75
    %v121 = vunpack.c.l.b16 %v76
    %v122 = vunpack.c.l.b16 %v77
    %v123 = vunpack.c.l.b16 %v78
    %v124 = vunpack.c.l.b16 %v79
    %v125 = vunpack.c.l.b16 %v80
    %v126 = vunpack.c.l.b16 %v81
    %v127 = vunpack.c.l.b16 %v82
    %v128 = vunpack.c.l.b16 %v83
    %v129 = vpack.c.b16 %v114, %v113
    %v130 = vpack.c.b16 %v116, %v115
    %v131 = vpack.c.b16 %v118, %v117
    %v132 = vpack.c.b16 %v120, %v119
    %v133 = vpack.c.b16 %v122, %v121
    %v134 = vpack.c.b16 %v124, %v123
    %v135 = vpack.c.b16 %v126, %v125
    %v136 = vpack.c.b16 %v128, %v127
    %145 = vmatprep.subr.bf16.mxu0 0
    %146 = vmatpush1.bf16.msra.mxu0 %v129
    %147 = vmatprep.subr.bf16.mxu0 0
    %148 = vmatpush1.bf16.msra.mxu0 %v130
    %149 = vmatprep.subr.bf16.mxu0 0
    %150 = vmatpush1.bf16.msra.mxu0 %v131
    %151 = vmatprep.subr.bf16.mxu0 0
    %152 = vmatpush1.bf16.msra.mxu0 %v132
    %153 = vmatprep.subr.bf16.mxu0 0
    %154 = vmatpush1.bf16.msra.mxu0 %v133
    %155 = vmatprep.subr.bf16.mxu0 0
    %156 = vmatpush1.bf16.msra.mxu0 %v134
    %157 = vmatprep.subr.bf16.mxu0 0
    %158 = vmatpush1.bf16.msra.mxu0 %v135
    %159 = vmatprep.subr.bf16.mxu0 0
    %160 = vmatpush1.bf16.msra.mxu0 %v136
    %161 = vmatprep.subr.bf16.mxu0 0
    %162 = vmatpush1.bf16.msra.mxu0 0
    %163 = vmatprep.subr.bf16.mxu0 0
    %164 = vmatpush1.bf16.msra.mxu0 0
    %165 = vmatprep.subr.bf16.mxu0 0
    %166 = vmatpush1.bf16.msra.mxu0 0
    %167 = vmatprep.subr.bf16.mxu0 0
    %168 = vmatpush1.bf16.msra.mxu0 0
    %169 = vmatprep.subr.bf16.mxu0 0
    %170 = vmatpush1.bf16.msra.mxu0 0
    %171 = vmatprep.subr.bf16.mxu0 0
    %172 = vmatpush1.bf16.msra.mxu0 0
    %173 = vmatprep.subr.bf16.mxu0 0
    %174 = vmatpush1.bf16.msra.mxu0 0
    %175 = vmatprep.subr.bf16.mxu0 0
    %176 = vmatpush1.bf16.msra.mxu0 0
    %177 = vmatprep.mubr.bf16.mxu0 0
    %178 = vmatmul.mubr.bf16.gmra.mrb[0].mxu0 %v95
    %v179 = vpop.f32.mrb[0].mxu0
    %v180 = vadd.f32 %v89, %v179
    %v181 = vpop.f32.mrb[0].mxu0
    %v182 = vpop.f32.mrb[0].mxu0
    %v183 = vadd.f32 %v89, %v182
    %v184 = vpop.f32.mrb[0].mxu0
    %185 = vdwg.mxu0
    %v186 = vmul.f32 %v180, 0.2
    %v187 = vmul.f32 %v183, 0.2
    %v188 = vmax.f32 %v180, %v186
    %v189 = vmax.f32 %v183, %v187
    %v190 = vpack.c.bf16 %v189, %v188
    %v192 = vunpack.c.l.b16 %v190
    %v193 = vunpack.c.h.b16 %v190
    %v194 = vpack.c.b16 %v192, %v192
    %v195 = vpack.c.b16 %v193, %v193
    %198 = vst [vmem:[#allocation9] sm:$0xf] %v194
    %199 = vst [vmem:[#allocation9 + $0x4] sm:$0xf] %v195
    %v200 = vld [vmem:[#allocation7] sm:$0xf]
    %v201 = vld [vmem:[#allocation7 + $0x4] sm:$0xf]
    %v202 = vld [vmem:[#allocation7 + $0x8] sm:$0xf]
    %v203 = vld [vmem:[#allocation7 + $0xc] sm:$0xf]
    %v204 = vld [vmem:[#allocation7 + $0x10] sm:$0xf]
    %v205 = vld [vmem:[#allocation7 + $0x14] sm:$0xf]
    %v206 = vld [vmem:[#allocation7 + $0x18] sm:$0xf]
    %v207 = vld [vmem:[#allocation7 + $0x1c] sm:$0xf]
    %v208 = vld [vmem:[#allocation7 + $0x20] sm:$0xf]
    %v209 = vld [vmem:[#allocation7 + $0x24] sm:$0xf]
    %v210 = vld [vmem:[#allocation7 + $0x28] sm:$0xf]
    %v211 = vld [vmem:[#allocation7 + $0x2c] sm:$0xf]
    %v212 = vld [vmem:[#allocation7 + $0x30] sm:$0xf]
    %v213 = vld [vmem:[#allocation7 + $0x34] sm:$0xf]
    %v214 = vld [vmem:[#allocation7 + $0x38] sm:$0xf]
    %v215 = vld [vmem:[#allocation7 + $0x3c] sm:$0xf]
    %v216 = vld [vmem:[%s4] sm:$0x1]
    %v218 = vlaneseq
    %v219 = vshrl.u32 %v218, 7
    %v220 = vsub.s32 0, %v219
    %v221 = vrot.slane %v216, %v220
    %v239 = vunpack.c.l.b16 %v200
    %v240 = vunpack.c.l.b16 %v201
    %v241 = vunpack.c.l.b16 %v202
    %v242 = vunpack.c.l.b16 %v203
    %v243 = vunpack.c.l.b16 %v204
    %v244 = vunpack.c.l.b16 %v205
    %v245 = vunpack.c.l.b16 %v206
    %v246 = vunpack.c.l.b16 %v207
    %v247 = vunpack.c.l.b16 %v208
    %v248 = vunpack.c.l.b16 %v209
    %v249 = vunpack.c.l.b16 %v210
    %v250 = vunpack.c.l.b16 %v211
    %v251 = vunpack.c.l.b16 %v212
    %v252 = vunpack.c.l.b16 %v213
    %v253 = vunpack.c.l.b16 %v214
    %v254 = vunpack.c.l.b16 %v215
    %v255 = vpack.c.b16 %v240, %v239
    %v256 = vpack.c.b16 %v242, %v241
    %v257 = vpack.c.b16 %v244, %v243
    %v258 = vpack.c.b16 %v246, %v245
    %v259 = vpack.c.b16 %v248, %v247
    %v260 = vpack.c.b16 %v250, %v249
    %v261 = vpack.c.b16 %v252, %v251
    %v262 = vpack.c.b16 %v254, %v253
    %271 = vmatprep.subr.bf16.mxu0 0
    %272 = vmatpush1.bf16.msra.mxu0 %v255
    %273 = vmatprep.subr.bf16.mxu0 0
    %274 = vmatpush1.bf16.msra.mxu0 %v256
    %275 = vmatprep.subr.bf16.mxu0 0
    %276 = vmatpush1.bf16.msra.mxu0 %v257
    %277 = vmatprep.subr.bf16.mxu0 0
    %278 = vmatpush1.bf16.msra.mxu0 %v258
    %279 = vmatprep.subr.bf16.mxu0 0
    %280 = vmatpush1.bf16.msra.mxu0 %v259
    %281 = vmatprep.subr.bf16.mxu0 0
    %282 = vmatpush1.bf16.msra.mxu0 %v260
    %283 = vmatprep.subr.bf16.mxu0 0
    %284 = vmatpush1.bf16.msra.mxu0 %v261
    %285 = vmatprep.subr.bf16.mxu0 0
    %286 = vmatpush1.bf16.msra.mxu0 %v262
    %287 = vmatprep.subr.bf16.mxu0 0
    %288 = vmatpush1.bf16.msra.mxu0 0
    %289 = vmatprep.subr.bf16.mxu0 0
    %290 = vmatpush1.bf16.msra.mxu0 0
    %291 = vmatprep.subr.bf16.mxu0 0
    %292 = vmatpush1.bf16.msra.mxu0 0
    %293 = vmatprep.subr.bf16.mxu0 0
    %294 = vmatpush1.bf16.msra.mxu0 0
    %295 = vmatprep.subr.bf16.mxu0 0
    %296 = vmatpush1.bf16.msra.mxu0 0
    %297 = vmatprep.subr.bf16.mxu0 0
    %298 = vmatpush1.bf16.msra.mxu0 0
    %299 = vmatprep.subr.bf16.mxu0 0
    %300 = vmatpush1.bf16.msra.mxu0 0
    %301 = vmatprep.subr.bf16.mxu0 0
    %302 = vmatpush1.bf16.msra.mxu0 0
    %303 = vmatprep.mubr.bf16.mxu0 0
    %304 = vmatmul.mubr.bf16.gmra.mrb[0].mxu0 %v190
    %v305 = vpop.f32.mrb[0].mxu0
    %v306 = vadd.f32 %v221, %v305
    %v307 = vpop.f32.mrb[0].mxu0
    %v308 = vpop.f32.mrb[0].mxu0
    %v309 = vadd.f32 %v221, %v308
    %v310 = vpop.f32.mrb[0].mxu0
    %311 = vdwg.mxu0
    %v312 = vmul.f32 %v306, %v306
    %v313 = vmul.f32 %v309, %v309
    %314 = vadd.xlane.f32.xlu0 %v312
    %v315 = vpop.xlane.xlu0 %314
    %316 = vadd.xlane.f32.xlu0 %v313
    %v317 = vpop.xlane.xlu0 %316
    %s318 = smul.u32 0, 16
    %v319 = vlaneseq
    %v320 = vshrl.u32 %v319, 7
    %v321 = vadd.s32 %v320, 8
    %v322 = vstv %s318
    %v323 = vadd.s32 %v322, %v320
    %v324 = vadd.s32 %v322, %v321
    %vm325 = vcmp.lt.s32.totalorder %v323, 8
    %vm326 = vcmp.lt.s32.totalorder %v324, 8
    %v327 = vsel %vm325, %v315, 1.0
    %v328 = vsel %vm326, %v317, 1.0
    %v329 = vrsqrt.pop %v327
    %v330 = vrsqrt.pop %v328
    %v331 = vmul.f32 %v306, %v329
    %v332 = vmul.f32 %v309, %v330
    %333 = vst [vmem:[#allocation8] sm:$0xff] %v331
    %334 = vst [vmem:[#allocation8 + $0x8] sm:$0xff] %v332
    // Predicated region
    $region34: #{tpu_custom_call.1} parent=1 // pred_check
      _
    $region35: #{tpu_custom_call.1} parent=1 // pred_check_branch
      %336 = sbr.rel (0) target = $region37
    $region36: #{tpu_custom_call.1} parent=1 // pred_region
      %s338 = ssub.s32 256, 256
      %339 = vsyncadd [#allocation4], %s338
      %s340 = sshll.u32 [#allocation8], 4
      %s341 = int_to_ptr.vmem [resolvable:$true] %s340
      %346 = dma.vmem_to_hbm [thread:$0]  %s341, 256, %s5, [#allocation4], 128, 128, 8
    $region37: #{tpu_custom_call.1} parent=1 // pred_fallthru
      _
    // Predicated region
    $region38: #{tpu_custom_call.1} parent=1 // pred_check
      _
    $region39: #{tpu_custom_call.1} parent=1 // pred_check_branch
      %348 = sbr.rel (0) target = $region41
    $region40: #{tpu_custom_call.1} parent=1 // pred_region
      %s350 = ssub.s32 128, 128
      %351 = vsyncadd [#allocation10], %s350
      %s352 = sshll.u32 [#allocation9], 4
      %s353 = int_to_ptr.vmem [resolvable:$true] %s352
      %358 = dma.vmem_to_hbm [thread:$0]  %s353, 128, %s6, [#allocation10], 64, 64, 4
    $region41: #{tpu_custom_call.1} parent=1 // pred_fallthru
      _
    // Predicated region
    $region42: #{tpu_custom_call.1} parent=1 // pred_check
      _
    $region43: #{tpu_custom_call.1} parent=1 // pred_check_branch
      %360 = sbr.rel (0) target = $region45
    $region44: #{tpu_custom_call.1} parent=1 // pred_region
      %361 = dma.done [#allocation4], 256
    $region45: #{tpu_custom_call.1} parent=1 // pred_fallthru
      _
    // Predicated region
    $region46: #{tpu_custom_call.1} parent=1 // pred_check
      _
    $region47: #{tpu_custom_call.1} parent=1 // pred_check_branch
      %363 = sbr.rel (0) target = $region49
    $region48: #{tpu_custom_call.1} parent=1 // pred_region
      %364 = dma.done [#allocation10], 128
    $region49: #{tpu_custom_call.1} parent=1 // pred_fallthru
      _
    %365 = vsyncpa [#allocation3], 1
    %366 = vsyncpa [#allocation6], 1
    %367 = vsyncpa [#allocation4], 1
    %368 = vsyncpa [#allocation10], 1

// kernel: tpu_custom_call.1
$region0: #{tpu_custom_call.1}
  #allocation0 [shape = 'u32[]', space=smem, size = 0x4, offset = 0x4, fixed_abs, tag = 'smem constant byte address 0x4 - core index']
  #allocation1 [shape = 'u32[144,128]{1,0:T(1,128)}', space=vmem, size = 0x12000, scoped, tag = 'internal scratch']
  %s0 = inlined_call_operand.hbm [shape: bf16[16,128], index: 0, kind: input, shape index: {}]
  %s1 = inlined_call_operand.hbm [shape: bf16[128,128], index: 1, kind: input, shape index: {}]
  %s2 = inlined_call_operand.vmem [shape: f32[1,128], index: 2, kind: input, shape index: {}]
  %s3 = inlined_call_operand.hbm [shape: bf16[128,128], index: 3, kind: input, shape index: {}]
  %s4 = inlined_call_operand.vmem [shape: f32[1,128], index: 4, kind: input, shape index: {}]
  %s5 = inlined_call_operand.hbm [shape: f32[16,128], index: 5, kind: output, shape index: {0}]
  %s6 = inlined_call_operand.hbm [shape: bf16[16,128], index: 6, kind: output, shape index: {1}]
  %7 = xla_tuple %s5, %s6
  %s8 = sld [smem:[#allocation0]]
  $region50: #{tpu_custom_call.1} parent=0
    _
  %s10 = ssub.s32 1, %s8
  %s11 = scalar_select 0, %s10, %s8
  $region1: #{tpu_custom_call.1} parent=0
    #allocation2 [shape = 'u8[4096]{0}', space=vmem, size = 0x1000, scoped, tag = 'input window, operand 0, single buffered']
    #allocation3 [shape = 's32[1]{0}', space=sflag, size = 0x4, scoped, tag = 'scoped memory for tpu_custom_call.1']
    #allocation4 [shape = 's32[1]{0}', space=sflag, size = 0x4, scoped, tag = 'scoped memory for tpu_custom_call.1']
    #allocation5 [shape = 'u8[32768]{0}', space=vmem, size = 0x8000, scoped, tag = 'input window, operand 1, single buffered']
    #allocation6 [shape = 's32[1]{0}', space=sflag, size = 0x4, scoped, tag = 'scoped memory for tpu_custom_call.1']
    #allocation7 [shape = 'u8[32768]{0}', space=vmem, size = 0x8000, scoped, tag = 'input window, operand 3, single buffered']
    #allocation8 [shape = 'u8[8192]{0}', space=vmem, size = 0x2000, scoped, tag = 'output window, operand 0, single buffered']
    #allocation9 [shape = 'u8[4096]{0}', space=vmem, size = 0x1000, scoped, tag = 'output window, operand 1, single buffered']
    #allocation10 [shape = 's32[1]{0}', space=sflag, size = 0x4, scoped, tag = 'scoped memory for tpu_custom_call.1']
    %12 = vsyncpa [#allocation3], 0
    %13 = vsyncpa [#allocation6], 0
    %14 = vsyncpa [#allocation4], 0
    %15 = vsyncpa [#allocation10], 0
    // Predicated region
    $region2: #{tpu_custom_call.1} parent=1 // pred_check
      _
    $region3: #{tpu_custom_call.1} parent=1 // pred_check_branch
      %17 = sbr.rel (0) target = $region5
    $region4: #{tpu_custom_call.1} parent=1 // pred_region
      %s19 = ssub.s32 128, 128
      %20 = vsyncadd [#allocation3], %s19
      %s21 = sshll.u32 [#allocation2], 4
      %s22 = int_to_ptr.vmem [resolvable:$true] %s21
      %27 = dma.hbm_to_vmem [thread:$0]  %s0, 128, %s22, [#allocation3], 64, 64, 4
    $region5: #{tpu_custom_call.1} parent=1 // pred_fallthru
      _
    // Predicated region
    $region6: #{tpu_custom_call.1} parent=1 // pred_check
      _
    $region7: #{tpu_custom_call.1} parent=1 // pred_check_branch
      %29 = sbr.rel (0) target = $region9
    $region8: #{tpu_custom_call.1} parent=1 // pred_region
      %s31 = ssub.s32 1024, 1024
      %32 = vsyncadd [#allocation6], %s31
      %s33 = sshll.u32 [#allocation5], 4
      %s34 = int_to_ptr.vmem [resolvable:$true] %s33
      %39 = dma.hbm_to_vmem [thread:$0]  %s1, 1024, %s34, [#allocation6], 64, 64, 4
    $region9: #{tpu_custom_call.1} parent=1 // pred_fallthru
      _
    // Predicated region
    $region10: #{tpu_custom_call.1} parent=1 // pred_check
      _
    $region11: #{tpu_custom_call.1} parent=1 // pred_check_branch
      %41 = sbr.rel (0) target = $region13
    $region12: #{tpu_custom_call.1} parent=1 // pred_region
      _
    $region13: #{tpu_custom_call.1} parent=1 // pred_fallthru
      _
    // Predicated region
    $region14: #{tpu_custom_call.1} parent=1 // pred_check
      _
    $region15: #{tpu_custom_call.1} parent=1 // pred_check_branch
      %43 = sbr.rel (0) target = $region17
    $region16: #{tpu_custom_call.1} parent=1 // pred_region
      %s45 = ssub.s32 1024, 1024
      %46 = vsyncadd [#allocation6], %s45
      %s47 = sshll.u32 [#allocation7], 4
      %s48 = int_to_ptr.vmem [resolvable:$true] %s47
      %53 = dma.hbm_to_vmem [thread:$0]  %s3, 1024, %s48, [#allocation6], 64, 64, 4
    $region17: #{tpu_custom_call.1} parent=1 // pred_fallthru
      _
    // Predicated region
    $region18: #{tpu_custom_call.1} parent=1 // pred_check
      _
    $region19: #{tpu_custom_call.1} parent=1 // pred_check_branch
      %55 = sbr.rel (0) target = $region21
    $region20: #{tpu_custom_call.1} parent=1 // pred_region
      _
    $region21: #{tpu_custom_call.1} parent=1 // pred_fallthru
      _
    // Predicated region
    $region22: #{tpu_custom_call.1} parent=1 // pred_check
      _
    $region23: #{tpu_custom_call.1} parent=1 // pred_check_branch
      %57 = sbr.rel (0) target = $region25
    $region24: #{tpu_custom_call.1} parent=1 // pred_region
      %58 = dma.done [#allocation3], 128
    $region25: #{tpu_custom_call.1} parent=1 // pred_fallthru
      _
    // Predicated region
    $region26: #{tpu_custom_call.1} parent=1 // pred_check
      _
    $region27: #{tpu_custom_call.1} parent=1 // pred_check_branch
      %60 = sbr.rel (0) target = $region29
    $region28: #{tpu_custom_call.1} parent=1 // pred_region
      %61 = dma.done [#allocation6], 1024
    $region29: #{tpu_custom_call.1} parent=1 // pred_fallthru
      _
    // Predicated region
    $region30: #{tpu_custom_call.1} parent=1 // pred_check
      _
    $region31: #{tpu_custom_call.1} parent=1 // pred_check_branch
      %63 = sbr.rel (0) target = $region33
    $region32: #{tpu_custom_call.1} parent=1 // pred_region
      %64 = dma.done [#allocation6], 1024
    $region33: #{tpu_custom_call.1} parent=1 // pred_fallthru
      _
    %v66 = vld [vmem:[#allocation2] sm:$0xf]
    %v67 = vld [vmem:[#allocation2 + $0x4] sm:$0xf]
    %v68 = vld [vmem:[#allocation5] sm:$0xf]
    %v69 = vld [vmem:[#allocation5 + $0x4] sm:$0xf]
    %v70 = vld [vmem:[#allocation5 + $0x8] sm:$0xf]
    %v71 = vld [vmem:[#allocation5 + $0xc] sm:$0xf]
    %v72 = vld [vmem:[#allocation5 + $0x10] sm:$0xf]
    %v73 = vld [vmem:[#allocation5 + $0x14] sm:$0xf]
    %v74 = vld [vmem:[#allocation5 + $0x18] sm:$0xf]
    %v75 = vld [vmem:[#allocation5 + $0x1c] sm:$0xf]
    %v76 = vld [vmem:[#allocation5 + $0x20] sm:$0xf]
    %v77 = vld [vmem:[#allocation5 + $0x24] sm:$0xf]
    %v78 = vld [vmem:[#allocation5 + $0x28] sm:$0xf]
    %v79 = vld [vmem:[#allocation5 + $0x2c] sm:$0xf]
    %v80 = vld [vmem:[#allocation5 + $0x30] sm:$0xf]
    %v81 = vld [vmem:[#allocation5 + $0x34] sm:$0xf]
    %v82 = vld [vmem:[#allocation5 + $0x38] sm:$0xf]
    %v83 = vld [vmem:[#allocation5 + $0x3c] sm:$0xf]
    %v84 = vld [vmem:[%s2] sm:$0x1]
    %v86 = vlaneseq
    %v87 = vshrl.u32 %v86, 7
    %v88 = vsub.s32 0, %v87
    %v89 = vrot.slane %v84, %v88
    %v93 = vunpack.c.l.b16 %v66
    %v94 = vunpack.c.l.b16 %v67
    %v95 = vpack.c.b16 %v94, %v93
    %v113 = vunpack.c.l.b16 %v68
    %v114 = vunpack.c.l.b16 %v69
    %v115 = vunpack.c.l.b16 %v70
    %v116 = vunpack.c.l.b16 %v71
    %v117 = vunpack.c.l.b16 %v72
    %v118 = vunpack.c.l.b16 %v73
    %v119 = vunpack.c.l.b16 %v74
    %v120 = vunpack.c.l.b16 %v75
    %v121 = vunpack.c.l.b16 %v76
    %v122 = vunpack.c.l.b16 %v77
    %v123 = vunpack.c.l.b16 %v78
    %v124 = vunpack.c.l.b16 %v79
    %v125 = vunpack.c.l.b16 %v80
    %v126 = vunpack.c.l.b16 %v81
    %v127 = vunpack.c.l.b16 %v82
    %v128 = vunpack.c.l.b16 %v83
    %v129 = vpack.c.b16 %v114, %v113
    %v130 = vpack.c.b16 %v116, %v115
    %v131 = vpack.c.b16 %v118, %v117
    %v132 = vpack.c.b16 %v120, %v119
    %v133 = vpack.c.b16 %v122, %v121
    %v134 = vpack.c.b16 %v124, %v123
    %v135 = vpack.c.b16 %v126, %v125
    %v136 = vpack.c.b16 %v128, %v127
    %145 = vmatprep.subr.bf16.mxu0 0
    %146 = vmatpush1.bf16.msra.mxu0 %v129
    %147 = vmatprep.subr.bf16.mxu0 0
    %148 = vmatpush1.bf16.msra.mxu0 %v130
    %149 = vmatprep.subr.bf16.mxu0 0
    %150 = vmatpush1.bf16.msra.mxu0 %v131
    %151 = vmatprep.subr.bf16.mxu0 0
    %152 = vmatpush1.bf16.msra.mxu0 %v132
    %153 = vmatprep.subr.bf16.mxu0 0
    %154 = vmatpush1.bf16.msra.mxu0 %v133
    %155 = vmatprep.subr.bf16.mxu0 0
    %156 = vmatpush1.bf16.msra.mxu0 %v134
    %157 = vmatprep.subr.bf16.mxu0 0
    %158 = vmatpush1.bf16.msra.mxu0 %v135
    %159 = vmatprep.subr.bf16.mxu0 0
    %160 = vmatpush1.bf16.msra.mxu0 %v136
    %161 = vmatprep.subr.bf16.mxu0 0
    %162 = vmatpush1.bf16.msra.mxu0 0
    %163 = vmatprep.subr.bf16.mxu0 0
    %164 = vmatpush1.bf16.msra.mxu0 0
    %165 = vmatprep.subr.bf16.mxu0 0
    %166 = vmatpush1.bf16.msra.mxu0 0
    %167 = vmatprep.subr.bf16.mxu0 0
    %168 = vmatpush1.bf16.msra.mxu0 0
    %169 = vmatprep.subr.bf16.mxu0 0
    %170 = vmatpush1.bf16.msra.mxu0 0
    %171 = vmatprep.subr.bf16.mxu0 0
    %172 = vmatpush1.bf16.msra.mxu0 0
    %173 = vmatprep.subr.bf16.mxu0 0
    %174 = vmatpush1.bf16.msra.mxu0 0
    %175 = vmatprep.subr.bf16.mxu0 0
    %176 = vmatpush1.bf16.msra.mxu0 0
    %177 = vmatprep.mubr.bf16.mxu0 0
    %178 = vmatmul.mubr.bf16.gmra.mrb[0].mxu0 %v95
    %v179 = vpop.f32.mrb[0].mxu0
    %v180 = vadd.f32 %v89, %v179
    %v181 = vpop.f32.mrb[0].mxu0
    %v182 = vpop.f32.mrb[0].mxu0
    %v183 = vadd.f32 %v89, %v182
    %v184 = vpop.f32.mrb[0].mxu0
    %185 = vdwg.mxu0
    %v186 = vmul.f32 %v180, 0.2
    %v187 = vmul.f32 %v183, 0.2
    %v188 = vmax.f32 %v180, %v186
    %v189 = vmax.f32 %v183, %v187
    %v190 = vpack.c.bf16 %v189, %v188
    %v192 = vunpack.c.l.b16 %v190
    %v193 = vunpack.c.h.b16 %v190
    %v194 = vpack.c.b16 %v192, %v192
    %v195 = vpack.c.b16 %v193, %v193
    %198 = vst [vmem:[#allocation9] sm:$0xf] %v194
    %199 = vst [vmem:[#allocation9 + $0x4] sm:$0xf] %v195
    %v200 = vld [vmem:[#allocation7] sm:$0xf]
    %v201 = vld [vmem:[#allocation7 + $0x4] sm:$0xf]
    %v202 = vld [vmem:[#allocation7 + $0x8] sm:$0xf]
    %v203 = vld [vmem:[#allocation7 + $0xc] sm:$0xf]
    %v204 = vld [vmem:[#allocation7 + $0x10] sm:$0xf]
    %v205 = vld [vmem:[#allocation7 + $0x14] sm:$0xf]
    %v206 = vld [vmem:[#allocation7 + $0x18] sm:$0xf]
    %v207 = vld [vmem:[#allocation7 + $0x1c] sm:$0xf]
    %v208 = vld [vmem:[#allocation7 + $0x20] sm:$0xf]
    %v209 = vld [vmem:[#allocation7 + $0x24] sm:$0xf]
    %v210 = vld [vmem:[#allocation7 + $0x28] sm:$0xf]
    %v211 = vld [vmem:[#allocation7 + $0x2c] sm:$0xf]
    %v212 = vld [vmem:[#allocation7 + $0x30] sm:$0xf]
    %v213 = vld [vmem:[#allocation7 + $0x34] sm:$0xf]
    %v214 = vld [vmem:[#allocation7 + $0x38] sm:$0xf]
    %v215 = vld [vmem:[#allocation7 + $0x3c] sm:$0xf]
    %v216 = vld [vmem:[%s4] sm:$0x1]
    %v218 = vlaneseq
    %v219 = vshrl.u32 %v218, 7
    %v220 = vsub.s32 0, %v219
    %v221 = vrot.slane %v216, %v220
    %v239 = vunpack.c.l.b16 %v200
    %v240 = vunpack.c.l.b16 %v201
    %v241 = vunpack.c.l.b16 %v202
    %v242 = vunpack.c.l.b16 %v203
    %v243 = vunpack.c.l.b16 %v204
    %v244 = vunpack.c.l.b16 %v205
    %v245 = vunpack.c.l.b16 %v206
    %v246 = vunpack.c.l.b16 %v207
    %v247 = vunpack.c.l.b16 %v208
    %v248 = vunpack.c.l.b16 %v209
    %v249 = vunpack.c.l.b16 %v210
    %v250 = vunpack.c.l.b16 %v211
    %v251 = vunpack.c.l.b16 %v212
    %v252 = vunpack.c.l.b16 %v213
    %v253 = vunpack.c.l.b16 %v214
    %v254 = vunpack.c.l.b16 %v215
    %v255 = vpack.c.b16 %v240, %v239
    %v256 = vpack.c.b16 %v242, %v241
    %v257 = vpack.c.b16 %v244, %v243
    %v258 = vpack.c.b16 %v246, %v245
    %v259 = vpack.c.b16 %v248, %v247
    %v260 = vpack.c.b16 %v250, %v249
    %v261 = vpack.c.b16 %v252, %v251
    %v262 = vpack.c.b16 %v254, %v253
    %271 = vmatprep.subr.bf16.mxu0 0
    %272 = vmatpush1.bf16.msra.mxu0 %v255
    %273 = vmatprep.subr.bf16.mxu0 0
    %274 = vmatpush1.bf16.msra.mxu0 %v256
    %275 = vmatprep.subr.bf16.mxu0 0
    %276 = vmatpush1.bf16.msra.mxu0 %v257
    %277 = vmatprep.subr.bf16.mxu0 0
    %278 = vmatpush1.bf16.msra.mxu0 %v258
    %279 = vmatprep.subr.bf16.mxu0 0
    %280 = vmatpush1.bf16.msra.mxu0 %v259
    %281 = vmatprep.subr.bf16.mxu0 0
    %282 = vmatpush1.bf16.msra.mxu0 %v260
    %283 = vmatprep.subr.bf16.mxu0 0
    %284 = vmatpush1.bf16.msra.mxu0 %v261
    %285 = vmatprep.subr.bf16.mxu0 0
    %286 = vmatpush1.bf16.msra.mxu0 %v262
    %287 = vmatprep.subr.bf16.mxu0 0
    %288 = vmatpush1.bf16.msra.mxu0 0
    %289 = vmatprep.subr.bf16.mxu0 0
    %290 = vmatpush1.bf16.msra.mxu0 0
    %291 = vmatprep.subr.bf16.mxu0 0
    %292 = vmatpush1.bf16.msra.mxu0 0
    %293 = vmatprep.subr.bf16.mxu0 0
    %294 = vmatpush1.bf16.msra.mxu0 0
    %295 = vmatprep.subr.bf16.mxu0 0
    %296 = vmatpush1.bf16.msra.mxu0 0
    %297 = vmatprep.subr.bf16.mxu0 0
    %298 = vmatpush1.bf16.msra.mxu0 0
    %299 = vmatprep.subr.bf16.mxu0 0
    %300 = vmatpush1.bf16.msra.mxu0 0
    %301 = vmatprep.subr.bf16.mxu0 0
    %302 = vmatpush1.bf16.msra.mxu0 0
    %303 = vmatprep.mubr.bf16.mxu0 0
    %304 = vmatmul.mubr.bf16.gmra.mrb[0].mxu0 %v190
    %v305 = vpop.f32.mrb[0].mxu0
    %v306 = vadd.f32 %v221, %v305
    %v307 = vpop.f32.mrb[0].mxu0
    %v308 = vpop.f32.mrb[0].mxu0
    %v309 = vadd.f32 %v221, %v308
    %v310 = vpop.f32.mrb[0].mxu0
    %311 = vdwg.mxu0
    %v312 = vmul.f32 %v306, %v306
    %v313 = vmul.f32 %v309, %v309
    %314 = vadd.xlane.f32.xlu0 %v312
    %v315 = vpop.xlane.xlu0 %314
    %316 = vadd.xlane.f32.xlu0 %v313
    %v317 = vpop.xlane.xlu0 %316
    %s318 = smul.u32 0, 16
    %v319 = vlaneseq
    %v320 = vshrl.u32 %v319, 7
    %v321 = vadd.s32 %v320, 8
    %v322 = vstv %s318
    %v323 = vadd.s32 %v322, %v320
    %v324 = vadd.s32 %v322, %v321
    %vm325 = vcmp.lt.s32.totalorder %v323, 8
    %vm326 = vcmp.lt.s32.totalorder %v324, 8
    %v327 = vsel %vm325, %v315, 1.0
    %v328 = vsel %vm326, %v317, 1.0
    %v329 = vrsqrt.pop %v327
    %v330 = vrsqrt.pop %v328
    %v331 = vmul.f32 %v306, %v329
    %v332 = vmul.f32 %v309, %v330
    %333 = vst [vmem:[#allocation8] sm:$0xff] %v331
    %334 = vst [vmem:[#allocation8 + $0x8] sm:$0xff] %v332
    // Predicated region
    $region34: #{tpu_custom_call.1} parent=1 // pred_check
      _
    $region35: #{tpu_custom_call.1} parent=1 // pred_check_branch
      %336 = sbr.rel (0) target = $region37
    $region36: #{tpu_custom_call.1} parent=1 // pred_region
      %s338 = ssub.s32 256, 256
      %339 = vsyncadd [#allocation4], %s338
      %s340 = sshll.u32 [#allocation8], 4
      %s341 = int_to_ptr.vmem [resolvable:$true] %s340
      %346 = dma.vmem_to_hbm [thread:$0]  %s341, 256, %s5, [#allocation4], 128, 128, 8
    $region37: #{tpu_custom_call.1} parent=1 // pred_fallthru
      _
    // Predicated region
    $region38: #{tpu_custom_call.1} parent=1 // pred_check
      _
    $region39: #{tpu_custom_call.1} parent=1 // pred_check_branch
      %348 = sbr.rel (0) target = $region41
    $region40: #{tpu_custom_call.1} parent=1 // pred_region
      %s350 = ssub.s32 128, 128
      %351 = vsyncadd [#allocation10], %s350
      %s352 = sshll.u32 [#allocation9], 4
      %s353 = int_to_ptr.vmem [resolvable:$true] %s352
      %358 = dma.vmem_to_hbm [thread:$0]  %s353, 128, %s6, [#allocation10], 64, 64, 4
    $region41: #{tpu_custom_call.1} parent=1 // pred_fallthru
      _
    // Predicated region
    $region42: #{tpu_custom_call.1} parent=1 // pred_check
      _
    $region43: #{tpu_custom_call.1} parent=1 // pred_check_branch
      %360 = sbr.rel (0) target = $region45
    $region44: #{tpu_custom_call.1} parent=1 // pred_region
      %361 = dma.done [#allocation4], 256
    $region45: #{tpu_custom_call.1} parent=1 // pred_fallthru
      _
    // Predicated region
    $region46: #{tpu_custom_call.1} parent=1 // pred_check
      _
    $region47: #{tpu_custom_call.1} parent=1 // pred_check_branch
      %363 = sbr.rel (0) target = $region49
    $region48: #{tpu_custom_call.1} parent=1 // pred_region
      %364 = dma.done [#allocation10], 128
    $region49: #{tpu_custom_call.1} parent=1 // pred_fallthru
      _
    %365 = vsyncpa [#allocation3], 1
    %366 = vsyncpa [#allocation6], 1
    %367 = vsyncpa [#allocation4], 1
    %368 = vsyncpa [#allocation10], 1

</llo_original>
